<compile_context>
chip_gen: v5e
topology: v5e:2x2
jax: 0.10.0
libtpu: 0.0.40
codegen_flags: <defaults>
</compile_context>

<pallas_src>
import functools

import jax
import jax.numpy as jnp
from jax import lax
from jax.experimental import pallas as pl
from jax.experimental.pallas import tpu as pltpu


def _feature_norm_kernel(x_ref, scale_ref, bias_ref, o_ref, *, eps):
    # x_ref / o_ref: (TB, HW) VMEM tile (lane-dense last dim)
    # scale_ref / bias_ref: (TB, 1) per-row parameters
    x = x_ref[...].astype(jnp.float32)

    hw = x.shape[-1]                        # static spatial element count
    inv_n = 1.0 / hw
    inv_nm1 = 1.0 / max(hw - 1, 1)          # guard against H*W == 1 (divide-by-zero)

    # Two-pass moments (numerically safe); per-row cross-lane sums land on the XLU slot.
    mean = jnp.sum(x, axis=-1, keepdims=True) * inv_n          # (TB, 1)
    centered = x - mean                                        # reused by the epilogue
    var = jnp.sum(centered * centered, axis=-1, keepdims=True) * inv_nm1
    std = jnp.sqrt(var)

    # Module semantics: divide by sqrt(std + eps) (sqrt of the *std*, not the variance).
    inv = lax.rsqrt(std + eps)                                 # EUP op, effectively free

    a = scale_ref[...] * inv                                   # (TB, 1)
    o_ref[...] = (centered * a + bias_ref[...]).astype(o_ref.dtype)


def feature_norm(x, scale, bias, eps=0.001, block_rows=None,
                 target_block_bytes=2 * 1024 * 1024,
                 vmem_budget_bytes=32 * 1024 * 1024):
    """x: (N, C, H, W); scale/bias broadcastable to (1, C, 1, 1)."""
    N, C, H, W = x.shape
    R, HW = N * C, H * W

    # Flatten: one row per (n, c) plane; reduction axis becomes the (lane-dense) last dim.
    x2 = x.reshape(R, HW)
    scale_rows = jnp.broadcast_to(
        jnp.asarray(scale, jnp.float32).reshape(1, C), (N, C)).reshape(R, 1)
    bias_rows = jnp.broadcast_to(
        jnp.asarray(bias, jnp.float32).reshape(1, C), (N, C)).reshape(R, 1)

    itemsize = jnp.dtype(x.dtype).itemsize
    hw_pad = ((HW + 127) // 128) * 128      # lane padding of the data tile in VMEM
    # Real per-row VMEM cost:
    #   pipeline buffers (double-buffered): x tile + out tile + two (tb,1) f32 param blocks,
    #     each param block lane-padded to (tb,128) -> 512 B/row/buffer.
    #   kernel scratch: f32 upcast + centered intermediate (~2 f32 rows), single copy
    #     (counted at 4 B/elem regardless of input dtype, so bf16 inputs are covered too).
    per_row_pipeline = 2 * (2 * hw_pad * itemsize + 2 * 128 * 4)
    per_row_scratch = 2 * hw_pad * 4
    per_row_total = per_row_pipeline + per_row_scratch

    if block_rows is not None:
        tb = block_rows
    else:
        row_bytes = hw_pad * itemsize
        tb_target = max(1, target_block_bytes // row_bytes)          # ~2 MiB of x per block
        tb_budget = max(1, (vmem_budget_bytes * 3 // 4) // per_row_total)  # 25% headroom
        tb = min(tb_target, tb_budget)

    if R <= 8:
        tb = R                              # full sublane dim: no 8-divisibility requirement
    else:
        tb = max(8, (min(tb, R) // 8) * 8)  # multiple of 8, ragged last block allowed
        # Guarantee >= 2 grid steps whenever possible so the "parallel" axis can split
        # across v7x's two TensorCores.
        tb = min(tb, ((pl.cdiv(R, 2) + 7) // 8) * 8)

    # TODO(synk): if HW is so large that even an 8-row block exceeds the VMEM budget
    # (e.g. 512x512 f32 planes), add a second "arbitrary" grid axis over HW with
    # sum/sumsq accumulators (pl.when init/finalize) and a second epilogue pass.

    grid = (pl.cdiv(R, tb),)

    kernel = functools.partial(_feature_norm_kernel, eps=eps)
    row_spec = pl.BlockSpec((tb, HW), lambda i: (i, 0))   # last dim = full HW (lane-dense)
    vec_spec = pl.BlockSpec((tb, 1), lambda i: (i, 0))    # per-row scale / bias

    out2 = pl.pallas_call(
        kernel,
        out_shape=jax.ShapeDtypeStruct((R, HW), x.dtype),   # no padding, no output slice
        grid_spec=pltpu.PrefetchScalarGridSpec(
            num_scalar_prefetch=0,
            grid=grid,
            in_specs=[row_spec, vec_spec, vec_spec],
            out_specs=row_spec,
        ),
        compiler_params=pltpu.CompilerParams(
            dimension_semantics=("parallel",),          # rows split across TCs on v7x
            vmem_limit_bytes=vmem_budget_bytes,         # 32 MiB: safe on v5e/v6e/v7x
        ),
    )(x2, scale_rows, bias_rows)

    return out2.reshape(N, C, H, W)


def feature_norm_ref(x, scale, bias, eps=0.001):
    # Pure-JAX reference matching torch semantics (unbiased std, sqrt(std + eps)).
    mean = jnp.mean(x, axis=(2, 3), keepdims=True)
    var = jnp.sum((x - mean) ** 2, axis=(2, 3), keepdims=True) / (
        x.shape[2] * x.shape[3] - 1
    )
    std = jnp.sqrt(var)
    return scale * ((x - mean) / jnp.sqrt(std + eps)) + bias


if __name__ == "__main__":
    # Module defaults: rank=4, feature_index=1, reduce_dims=(2, 3), eps=1e-3.
    N, C, H, W = 2, 4, 16, 16

    key = jax.random.PRNGKey(0)
    x = jax.random.normal(key, (N, C, H, W), dtype=jnp.float32)

    # Deterministic parameter init matching nn.Module __init__:
    # scale = ones([1, C, 1, 1]), bias = zeros([1, C, 1, 1]).
    scale = jnp.ones((1, C, 1, 1), dtype=jnp.float32)
    bias = jnp.zeros((1, C, 1, 1), dtype=jnp.float32)

    out = feature_norm(x, scale, bias, eps=0.001)
    out = jax.block_until_ready(out)

    ref = feature_norm_ref(x, scale, bias, eps=0.001)
    assert out.shape == (N, C, H, W)
    assert jnp.allclose(out, ref, atol=1e-5, rtol=1e-5)

    print("KERNEL_OK")
</pallas_src>

<mosaic_0001>
module attributes {stable_mosaic.version = 11 : i64} {
  func.func @_feature_norm_kernel(%arg0: i32, %arg1: memref<8x256xf32, #tpu.memory_space<vmem>>, %arg2: memref<8x1xf32, #tpu.memory_space<vmem>>, %arg3: memref<8x1xf32, #tpu.memory_space<vmem>>, %arg4: memref<8x256xf32, #tpu.memory_space<vmem>>) attributes {dimension_semantics = [#tpu.dimension_semantics<parallel>], iteration_bounds = array<i64: 1>, scalar_prefetch = 0 : i64, scratch_operands = 0 : i64, tpu.core_type = #tpu.core_type<tc>, window_params = [{transform_indices = @transform_0, window_bounds = array<i64: 8, 256>}, {transform_indices = @transform_1, window_bounds = array<i64: 8, 1>}, {transform_indices = @transform_2, window_bounds = array<i64: 8, 1>}, {transform_indices = @transform_3, window_bounds = array<i64: 8, 256>}]} {
    %c0 = arith.constant 0 : index
    %c0_0 = arith.constant 0 : index
    %0 = vector.load %arg1[%c0, %c0_0] : memref<8x256xf32, #tpu.memory_space<vmem>>, vector<8x256xf32>
    %cst = arith.constant dense<0.000000e+00> : vector<8xf32>
    %1 = vector.multi_reduction <add>, %0, %cst [1] : vector<8x256xf32> to vector<8xf32>
    %2 = vector.shape_cast %1 : vector<8xf32> to vector<8x1xf32>
    %cst_1 = arith.constant 3.906250e-03 : f32
    %3 = vector.broadcast %cst_1 : f32 to vector<8x1xf32>
    %4 = arith.mulf %2, %3 : vector<8x1xf32>
    %5 = vector.broadcast %4 : vector<8x1xf32> to vector<8x256xf32>
    %6 = arith.subf %0, %5 : vector<8x256xf32>
    %7 = arith.mulf %6, %6 : vector<8x256xf32>
    %cst_2 = arith.constant dense<0.000000e+00> : vector<8xf32>
    %8 = vector.multi_reduction <add>, %7, %cst_2 [1] : vector<8x256xf32> to vector<8xf32>
    %9 = vector.shape_cast %8 : vector<8xf32> to vector<8x1xf32>
    %cst_3 = arith.constant 0.00392156886 : f32
    %10 = vector.broadcast %cst_3 : f32 to vector<8x1xf32>
    %11 = arith.mulf %9, %10 : vector<8x1xf32>
    %12 = math.sqrt %11 : vector<8x1xf32>
    %cst_4 = arith.constant 1.000000e-03 : f32
    %13 = vector.broadcast %cst_4 : f32 to vector<8x1xf32>
    %14 = arith.addf %12, %13 : vector<8x1xf32>
    %15 = math.rsqrt %14 : vector<8x1xf32>
    %c0_5 = arith.constant 0 : index
    %c0_6 = arith.constant 0 : index
    %16 = vector.load %arg2[%c0_5, %c0_6] : memref<8x1xf32, #tpu.memory_space<vmem>>, vector<8x1xf32>
    %17 = arith.mulf %16, %15 : vector<8x1xf32>
    %18 = vector.broadcast %17 : vector<8x1xf32> to vector<8x256xf32>
    %19 = arith.mulf %6, %18 : vector<8x256xf32>
    %c0_7 = arith.constant 0 : index
    %c0_8 = arith.constant 0 : index
    %20 = vector.load %arg3[%c0_7, %c0_8] : memref<8x1xf32, #tpu.memory_space<vmem>>, vector<8x1xf32>
    %21 = vector.broadcast %20 : vector<8x1xf32> to vector<8x256xf32>
    %22 = arith.addf %19, %21 : vector<8x256xf32>
    %c0_9 = arith.constant 0 : index
    %c0_10 = arith.constant 0 : index
    %23 = vector.load %arg4[%c0_9, %c0_10] : memref<8x256xf32, #tpu.memory_space<vmem>>, vector<8x256xf32>
    tpu.vector_store %arg4[%c0_9, %c0_10], %22 {strides = array<i32>} : memref<8x256xf32, #tpu.memory_space<vmem>>, vector<8x256xf32>,
    return
  }
  func.func @transform_0(%arg0: i32) -> (i32, i32) {
    %c0_i32 = arith.constant 0 : i32
    %c0_i32_0 = arith.constant 0 : i32
    return %arg0, %c0_i32 : i32, i32
  }
  func.func @transform_1(%arg0: i32) -> (i32, i32) {
    %c0_i32 = arith.constant 0 : i32
    %c0_i32_0 = arith.constant 0 : i32
    return %arg0, %c0_i32 : i32, i32
  }
  func.func @transform_2(%arg0: i32) -> (i32, i32) {
    %c0_i32 = arith.constant 0 : i32
    %c0_i32_0 = arith.constant 0 : i32
    return %arg0, %c0_i32 : i32, i32
  }
  func.func @transform_3(%arg0: i32) -> (i32, i32) {
    %c0_i32 = arith.constant 0 : i32
    %c0_i32_0 = arith.constant 0 : i32
    return %arg0, %c0_i32 : i32, i32
  }
}

</mosaic_0001>

<llo_original>
// kernel: tpu_custom_call.1
$region0: #{tpu_custom_call.1}
  #allocation0 [shape = 'u32[]', space=smem, size = 0x4, offset = 0x4, fixed_abs, tag = 'smem constant byte address 0x4 - core index']
  #allocation1 [shape = 'u32[72,128]{1,0:T(1,128)}', space=vmem, size = 0x9000, scoped, tag = 'internal scratch']
  %s0 = inlined_call_operand.vmem [shape: f32[8,256], index: 0, kind: input, shape index: {}]
  %s1 = inlined_call_operand.vmem [shape: f32[8,1], index: 1, kind: input, shape index: {}]
  %s2 = inlined_call_operand.vmem [shape: f32[8,1], index: 2, kind: input, shape index: {}]
  %s3 = inlined_call_operand.hbm [shape: f32[8,256], index: 3, kind: output, shape index: {}]
  %s4 = sld [smem:[#allocation0]]
  $region22: #{tpu_custom_call.1} parent=0
    _
  %s6 = ssub.s32 1, %s4
  %s7 = scalar_select 0, %s6, %s4
  $region1: #{tpu_custom_call.1} parent=0
    #allocation2 [shape = 'u8[8192]{0}', space=vmem, size = 0x2000, scoped, tag = 'output window, operand 0, single buffered']
    #allocation3 [shape = 's32[1]{0}', space=sflag, size = 0x4, scoped, tag = 'scoped memory for tpu_custom_call.1']
    %8 = vsyncpa [#allocation3], 0
    // Predicated region
    $region2: #{tpu_custom_call.1} parent=1 // pred_check
      _
    $region3: #{tpu_custom_call.1} parent=1 // pred_check_branch
      %10 = sbr.rel (0) target = $region5
    $region4: #{tpu_custom_call.1} parent=1 // pred_region
      _
    $region5: #{tpu_custom_call.1} parent=1 // pred_fallthru
      _
    // Predicated region
    $region6: #{tpu_custom_call.1} parent=1 // pred_check
      _
    $region7: #{tpu_custom_call.1} parent=1 // pred_check_branch
      %12 = sbr.rel (0) target = $region9
    $region8: #{tpu_custom_call.1} parent=1 // pred_region
      _
    $region9: #{tpu_custom_call.1} parent=1 // pred_fallthru
      _
    // Predicated region
    $region10: #{tpu_custom_call.1} parent=1 // pred_check
      _
    $region11: #{tpu_custom_call.1} parent=1 // pred_check_branch
      %14 = sbr.rel (0) target = $region13
    $region12: #{tpu_custom_call.1} parent=1 // pred_region
      _
    $region13: #{tpu_custom_call.1} parent=1 // pred_fallthru
      _
    %v15 = vld [vmem:[%s0] sm:$0xff]
    %v16 = vld [vmem:[%s0 + $0x8] sm:$0xff]
    %v17 = vadd.f32 %v15, %v16
    %18 = vadd.xlane.f32.xlu0 %v17
    %v19 = vpop.xlane.xlu0 %18
    %v20 = vmul.f32 %v19, 0.00390625
    %v21 = vsub.f32 %v15, %v20
    %v22 = vsub.f32 %v16, %v20
    %v23 = vmul.f32 %v21, %v21
    %v24 = vmul.f32 %v22, %v22
    %v25 = vadd.f32 %v23, %v24
    %26 = vadd.xlane.f32.xlu0 %v25
    %v27 = vpop.xlane.xlu0 %26
    %v28 = vmul.f32 %v27, 0.003921569
    %v29 = vrsqrt.pop %v28
    %v30 = vmul.f32 %v29, %v28
    %v31 = vmul.f32 %v30, %v29
    %v32 = vmul.f32 0.5, %v31
    %v33 = vsub.f32 1.5, %v32
    %v34 = vmul.f32 %v29, %v33
    %v35 = vmul.f32 %v28, %v34
    %vm36 = vcmp.eq.f32.partialorder %v28, inf
    %v37 = vsel %vm36, %v28, %v35
    %vm38 = vcmp.eq.f32.partialorder %v28, 0.0
    %v39 = vand.u32 %v28, 2147483648
    %v40 = vsel %vm38, %v39, %v37
    %v41 = vadd.f32 %v40, 0.001
    %v42 = vrsqrt.pop %v41
    %v43 = vmul.f32 %v42, %v41
    %v44 = vmul.f32 %v43, %v42
    %v45 = vmul.f32 0.5, %v44
    %v46 = vsub.f32 1.5, %v45
    %v47 = vmul.f32 %v42, %v46
    %vm48 = vweird.f32 %v41
    %vm49 = vweird.f32 %v42
    %vm50 = vmor %vm48, %vm49
    %v51 = vsel %vm50, %v42, %v47
    %v52 = vld [vmem:[%s1] sm:$0xff]
    %v53 = vmul.f32 %v52, %v51
    %55 = vset.pattern.permute.xlu0 0
    %56 = vperm.xlu0 %55, %v53
    %v57 = vpop.permute.xlu0 %56
    %v59 = vmul.f32 %v21, %v57
    %v60 = vmul.f32 %v22, %v57
    %v61 = vld [vmem:[%s2] sm:$0xff]
    %63 = vset.pattern.permute.xlu0 0
    %64 = vperm.xlu0 %63, %v61
    %v65 = vpop.permute.xlu0 %64
    %v67 = vadd.f32 %v59, %v65
    %v68 = vadd.f32 %v60, %v65
    %69 = vst [vmem:[#allocation2] sm:$0xff] %v67
    %70 = vst [vmem:[#allocation2 + $0x8] sm:$0xff] %v68
    // Predicated region
    $region14: #{tpu_custom_call.1} parent=1 // pred_check
      _
    $region15: #{tpu_custom_call.1} parent=1 // pred_check_branch
      %72 = sbr.rel (0) target = $region17
    $region16: #{tpu_custom_call.1} parent=1 // pred_region
      %74 = vsyncadd [#allocation3], 0
      %s76 = sshll.u32 [#allocation2], 4
      %s77 = int_to_ptr.vmem [resolvable:$true] %s76
      %s78 = sshll.u32 %s3, 4
      %s79 = int_to_ptr.hbm [resolvable:$true] %s78
      %81 = dma.vmem_to_hbm [thread:$0]  %s77, 256, %s79, [#allocation3]
    $region17: #{tpu_custom_call.1} parent=1 // pred_fallthru
      _
    // Predicated region
    $region18: #{tpu_custom_call.1} parent=1 // pred_check
      _
    $region19: #{tpu_custom_call.1} parent=1 // pred_check_branch
      %83 = sbr.rel (0) target = $region21
    $region20: #{tpu_custom_call.1} parent=1 // pred_region
      %85 = dma.done [#allocation3], 256
    $region21: #{tpu_custom_call.1} parent=1 // pred_fallthru
      _
    %86 = vsyncpa [#allocation3], 1

</llo_original>
